<compile_context>
chip_gen: v7x
topology: tpu7x:2x2x1
jax: 0.10.0
libtpu: 0.0.40
codegen_flags: <defaults>
</compile_context>

<pallas_src>
import functools

import numpy as np
import jax
import jax.numpy as jnp
from jax import lax
from jax.experimental import pallas as pl
from jax.experimental.pallas import tpu as pltpu


_EPS = 1e-5


# ---------------------------------------------------------------------------
# Fused kernel (operates on lane-dense (C, F) frame slabs, everything in VMEM)
# ---------------------------------------------------------------------------

def _down_fused_kernel(data_ref, p_ref, o_ref, *, cin_p, wpad, inv_count,
                       w2_off, vec_off):
    cout_p, f = o_ref.shape

    # --- MaxPool2d(2,2): elementwise max of the four corner slabs -----------
    pooled = jnp.maximum(
        jnp.maximum(data_ref[0 * cin_p:1 * cin_p, :],
                    data_ref[1 * cin_p:2 * cin_p, :]),
        jnp.maximum(data_ref[2 * cin_p:3 * cin_p, :],
                    data_ref[3 * cin_p:4 * cin_p, :]))          # (cin_p, F)

    # --- hoisted invariants (JAX does not CSE broadcast_in_dim) -------------
    mask = jnp.broadcast_to(data_ref[4 * cin_p:4 * cin_p + 1, :],
                            (cout_p, f))                        # 1 = real pixel
    w1 = p_ref[:, 0:9 * cin_p]                                  # (cout_p, 9*cin_p)
    w2 = p_ref[:, w2_off:w2_off + 9 * cout_p]                   # (cout_p, 9*cout_p)
    b1 = p_ref[:, vec_off + 0:vec_off + 1]                      # (cout_p, 1)
    b2 = p_ref[:, vec_off + 1:vec_off + 2]
    gamma_b = jnp.broadcast_to(p_ref[:, vec_off + 2:vec_off + 3], (cout_p, f))
    beta_b = jnp.broadcast_to(p_ref[:, vec_off + 3:vec_off + 4], (cout_p, f))

    def conv3x3(y, w, b):
        # 9 conv taps = static lane-rolls of the frame slab (XLU slot), stacked
        # once so the whole contraction is a single MXU matmul (f32 accumulate).
        # Wrapped lanes only reach zero lane-pad / masked halo positions
        # (guaranteed by the wrapper-side static guard), so the wrap is inert.
        taps = jnp.concatenate(
            [y if (ty == 1 and tx == 1) else
             pltpu.roll(y, (-((ty - 1) * wpad + (tx - 1))) % f, axis=1)
             for ty in range(3) for tx in range(3)],
            axis=0)                                             # (9*c_in, F)
        return jnp.dot(w, taps, preferred_element_type=jnp.float32) + b

    def bn_relu(y):
        # Training-mode BN over the valid pixels (biased variance) + ReLU;
        # halo/pad positions are re-zeroed so the result is directly conv-ready.
        mean = jnp.sum(y * mask, axis=1, keepdims=True) * inv_count
        diff = y - mean
        var = jnp.sum(diff * diff * mask, axis=1, keepdims=True) * inv_count
        inv = lax.rsqrt(var + _EPS)                             # EUP rsqrt
        return jnp.maximum(gamma_b * (diff * inv) + beta_b, 0.0) * mask

    # --- conv1 + shared BatchNorm + ReLU, conv2 + shared BatchNorm + ReLU ----
    y = bn_relu(conv3x3(pooled, w1, b1))
    y = bn_relu(conv3x3(y, w2, b2))
    o_ref[...] = y                                              # dense 128-lane store


# ---------------------------------------------------------------------------
# Wrapper: layout plumbing + single fused pallas_call
# ---------------------------------------------------------------------------

def down_forward(x_nchw, params):
    w1, b1, w2, b2, gamma, beta = params
    n, cin, h, w = x_nchw.shape
    cout = w1.shape[0]
    hp, wp = h // 2, w // 2
    hpad, wpad = hp + 2, wp + 2
    frame = n * hpad * wpad                        # flattened padded spatial frame
    f_lanes = ((frame + 127) // 128) * 128         # round up to full 128-lane tiles
    # Static guard: roll-wrapped lanes must land in the zero lane-pad region.
    assert f_lanes - frame >= wpad + 1, (f_lanes, frame, wpad)

    cin_p = ((cin + 7) // 8) * 8                   # sublane-align channel slabs
    cout_p = ((cout + 7) // 8) * 8
    count = n * hp * wp                            # valid pixels per channel (BN)
    inv_count = 1.0 / count

    # ---- lane-dense framing of the four 2x2-pool corners + the valid mask ---
    def to_frame(t, c_pad):                        # (N, C, hp, wp) -> (c_pad, F)
        c = t.shape[1]
        t = jnp.pad(t, ((0, 0), (0, c_pad - c), (1, 1), (1, 1)))   # zero conv halo
        t = jnp.transpose(t, (1, 0, 2, 3)).reshape(c_pad, frame)   # channels->sublanes
        return jnp.pad(t, ((0, 0), (0, f_lanes - frame)))          # lane-tile pad

    data = jnp.concatenate(
        [to_frame(x_nchw[:, :, i::2, j::2], cin_p) for i in (0, 1) for j in (0, 1)]
        + [to_frame(jnp.ones((n, 1, hp, wp), jnp.float32), 1)],
        axis=0)                                    # (4*cin_p + 1, F) single slab
    # TODO(synk): in a full UNet keep this (C, F) frame as the persistent
    # inter-block activation layout so frame/un-frame happens once per network.

    # ---- one packed parameter slab: [w1 | w2 | b1 b2 gamma beta] ------------
    w1_w, w2_w = 9 * cin_p, 9 * cout_p
    w2_off = ((w1_w + 127) // 128) * 128           # lane-tile aligned sections
    vec_off = w2_off + ((w2_w + 127) // 128) * 128
    p_width = vec_off + 4

    def pack_w(wt, ci, ci_p):                      # torch OIHW -> (cout_p, 9*ci_p)
        wpk = jnp.zeros((cout_p, 3, 3, ci_p), jnp.float32)
        wpk = wpk.at[:cout, :, :, :ci].set(jnp.transpose(wt, (0, 2, 3, 1)))
        return wpk.reshape(cout_p, 9 * ci_p)       # lane index = (ky*3+kx)*ci_p + c

    def pad_vec(v):
        return jnp.pad(v, (0, cout_p - cout))

    p = jnp.zeros((cout_p, p_width), jnp.float32)
    p = p.at[:, 0:w1_w].set(pack_w(w1, cin, cin_p))
    p = p.at[:, w2_off:w2_off + w2_w].set(pack_w(w2, cout, cout_p))
    p = p.at[:, vec_off + 0].set(pad_vec(b1))
    p = p.at[:, vec_off + 1].set(pad_vec(b2))
    p = p.at[:, vec_off + 2].set(pad_vec(gamma))
    p = p.at[:, vec_off + 3].set(pad_vec(beta))

    kernel = functools.partial(_down_fused_kernel, cin_p=cin_p, wpad=wpad,
                               inv_count=inv_count, w2_off=w2_off,
                               vec_off=vec_off)

    flops = 2 * 9 * cout * (cin + cout) * count + 12 * cout * count
    bytes_accessed = 4 * (data.size + p.size + cout_p * f_lanes)
    out = pl.pallas_call(
        kernel,
        out_shape=jax.ShapeDtypeStruct((cout_p, f_lanes), jnp.float32),
        in_specs=[pl.BlockSpec(memory_space=pltpu.MemorySpace.VMEM)] * 2,
        out_specs=pl.BlockSpec(memory_space=pltpu.MemorySpace.VMEM),
        cost_estimate=pl.CostEstimate(flops=flops, transcendentals=2 * cout,
                                      bytes_accessed=bytes_accessed),
    )(data, p)

    # Un-frame: drop channel/lane padding + conv halo, back to NCHW.
    out = out[:cout, :frame].reshape(cout, n, hpad, wpad)[:, :, 1:hp + 1, 1:wp + 1]
    return jnp.transpose(out, (1, 0, 2, 3))


# ---------------------------------------------------------------------------
# Pure-JAX reference (for correctness check)
# ---------------------------------------------------------------------------

def down_reference(x_nchw, params):
    w1, b1, w2, b2, gamma, beta = params
    cout = w1.shape[0]

    x = lax.reduce_window(x_nchw, -jnp.inf, lax.max,
                          (1, 1, 2, 2), (1, 1, 2, 2), "VALID")

    def conv(x, w, b):
        y = lax.conv_general_dilated(
            x, w, window_strides=(1, 1), padding=((1, 1), (1, 1)),
            dimension_numbers=("NCHW", "OIHW", "NCHW"),
            precision=lax.Precision.HIGHEST)
        return y + b.reshape(1, -1, 1, 1)

    def bn_relu(x):
        mean = jnp.mean(x, axis=(0, 2, 3), keepdims=True)
        var = jnp.mean((x - mean) ** 2, axis=(0, 2, 3), keepdims=True)
        xn = (x - mean) / jnp.sqrt(var + 1e-5)
        return jnp.maximum(gamma.reshape(1, cout, 1, 1) * xn
                           + beta.reshape(1, cout, 1, 1), 0.0)

    y = bn_relu(conv(x, w1, b1))
    y = bn_relu(conv(y, w2, b2))
    return y


# ---------------------------------------------------------------------------
# Main
# ---------------------------------------------------------------------------

if __name__ == "__main__":
    key = jax.random.PRNGKey(0)
    k_x, k_w1, k_b1, k_w2, k_b2, k_g, k_be = jax.random.split(key, 7)

    N, C_IN, C_OUT, H, W = 2, 4, 8, 16, 16

    x = jax.random.normal(k_x, (N, C_IN, H, W), dtype=jnp.float32)

    # Deterministic synthetic parameters (torch Conv2d weight layout: OIHW).
    s1 = 1.0 / np.sqrt(C_IN * 9)
    s2 = 1.0 / np.sqrt(C_OUT * 9)
    w1 = s1 * jax.random.normal(k_w1, (C_OUT, C_IN, 3, 3), dtype=jnp.float32)
    b1 = s1 * jax.random.normal(k_b1, (C_OUT,), dtype=jnp.float32)
    w2 = s2 * jax.random.normal(k_w2, (C_OUT, C_OUT, 3, 3), dtype=jnp.float32)
    b2 = s2 * jax.random.normal(k_b2, (C_OUT,), dtype=jnp.float32)
    gamma = 1.0 + 0.1 * jax.random.normal(k_g, (C_OUT,), dtype=jnp.float32)
    beta = 0.1 * jax.random.normal(k_be, (C_OUT,), dtype=jnp.float32)

    params = (w1, b1, w2, b2, gamma, beta)

    out = jax.block_until_ready(jax.jit(down_forward)(x, params))
    ref = jax.block_until_ready(down_reference(x, params))

    assert out.shape == (N, C_OUT, H // 2, W // 2), out.shape
    if not np.allclose(np.asarray(out), np.asarray(ref), rtol=1e-3, atol=1e-3):
        raise AssertionError("Pallas Down kernel does not match reference")

    print("KERNEL_OK")
</pallas_src>

<mosaic_0001>
module attributes {stable_mosaic.version = 11 : i64} {
  func.func @_down_fused_kernel(%arg0: memref<33x256xf32, #tpu.memory_space<vmem>>, %arg1: memref<8x260xf32, #tpu.memory_space<vmem>>, %arg2: memref<8x256xf32, #tpu.memory_space<vmem>>) attributes {dimension_semantics = [], scalar_prefetch = 0 : i64, scratch_operands = 0 : i64, tpu.core_type = #tpu.core_type<tc>} {
    %c0 = arith.constant 0 : index
    %c0_0 = arith.constant 0 : index
    %0 = vector.load %arg0[%c0, %c0_0] : memref<33x256xf32, #tpu.memory_space<vmem>>, vector<8x256xf32>
    %c8 = arith.constant 8 : index
    %c0_1 = arith.constant 0 : index
    %1 = vector.load %arg0[%c8, %c0_1] : memref<33x256xf32, #tpu.memory_space<vmem>>, vector<8x256xf32>
    %2 = arith.maximumf %0, %1 : vector<8x256xf32>
    %c16 = arith.constant 16 : index
    %c0_2 = arith.constant 0 : index
    %3 = vector.load %arg0[%c16, %c0_2] : memref<33x256xf32, #tpu.memory_space<vmem>>, vector<8x256xf32>
    %c24 = arith.constant 24 : index
    %c0_3 = arith.constant 0 : index
    %4 = vector.load %arg0[%c24, %c0_3] : memref<33x256xf32, #tpu.memory_space<vmem>>, vector<8x256xf32>
    %5 = arith.maximumf %3, %4 : vector<8x256xf32>
    %6 = arith.maximumf %2, %5 : vector<8x256xf32>
    %c32 = arith.constant 32 : index
    %c0_4 = arith.constant 0 : index
    %7 = vector.load %arg0[%c32, %c0_4] : memref<33x256xf32, #tpu.memory_space<vmem>>, vector<1x256xf32>
    %8 = vector.shape_cast %7 : vector<1x256xf32> to vector<1x256xf32>
    %9 = vector.broadcast %8 : vector<1x256xf32> to vector<8x256xf32>
    %c0_5 = arith.constant 0 : index
    %c0_6 = arith.constant 0 : index
    %10 = vector.load %arg1[%c0_5, %c0_6] : memref<8x260xf32, #tpu.memory_space<vmem>>, vector<8x72xf32>
    %c0_7 = arith.constant 0 : index
    %c128 = arith.constant 128 : index
    %11 = vector.load %arg1[%c0_7, %c128] : memref<8x260xf32, #tpu.memory_space<vmem>>, vector<8x72xf32>
    %c0_8 = arith.constant 0 : index
    %c256 = arith.constant 256 : index
    %12 = vector.load %arg1[%c0_8, %c256] : memref<8x260xf32, #tpu.memory_space<vmem>>, vector<8x1xf32>
    %c0_9 = arith.constant 0 : index
    %c257 = arith.constant 257 : index
    %13 = vector.load %arg1[%c0_9, %c257] : memref<8x260xf32, #tpu.memory_space<vmem>>, vector<8x1xf32>
    %c0_10 = arith.constant 0 : index
    %c258 = arith.constant 258 : index
    %14 = vector.load %arg1[%c0_10, %c258] : memref<8x260xf32, #tpu.memory_space<vmem>>, vector<8x1xf32>
    %15 = vector.shape_cast %14 : vector<8x1xf32> to vector<8x1xf32>
    %16 = vector.broadcast %15 : vector<8x1xf32> to vector<8x256xf32>
    %c0_11 = arith.constant 0 : index
    %c259 = arith.constant 259 : index
    %17 = vector.load %arg1[%c0_11, %c259] : memref<8x260xf32, #tpu.memory_space<vmem>>, vector<8x1xf32>
    %18 = vector.shape_cast %17 : vector<8x1xf32> to vector<8x1xf32>
    %19 = vector.broadcast %18 : vector<8x1xf32> to vector<8x256xf32>
    %c11_i32 = arith.constant 11 : i32
    %20 = tpu.dynamic_rotate %6 by %c11_i32 dim 1 : vector<8x256xf32>, i32 -> vector<8x256xf32>
    %c10_i32 = arith.constant 10 : i32
    %21 = tpu.dynamic_rotate %6 by %c10_i32 dim 1 : vector<8x256xf32>, i32 -> vector<8x256xf32>
    %c9_i32 = arith.constant 9 : i32
    %22 = tpu.dynamic_rotate %6 by %c9_i32 dim 1 : vector<8x256xf32>, i32 -> vector<8x256xf32>
    %c1_i32 = arith.constant 1 : i32
    %23 = tpu.dynamic_rotate %6 by %c1_i32 dim 1 : vector<8x256xf32>, i32 -> vector<8x256xf32>
    %c255_i32 = arith.constant 255 : i32
    %24 = tpu.dynamic_rotate %6 by %c255_i32 dim 1 : vector<8x256xf32>, i32 -> vector<8x256xf32>
    %c247_i32 = arith.constant 247 : i32
    %25 = tpu.dynamic_rotate %6 by %c247_i32 dim 1 : vector<8x256xf32>, i32 -> vector<8x256xf32>
    %c246_i32 = arith.constant 246 : i32
    %26 = tpu.dynamic_rotate %6 by %c246_i32 dim 1 : vector<8x256xf32>, i32 -> vector<8x256xf32>
    %c245_i32 = arith.constant 245 : i32
    %27 = tpu.dynamic_rotate %6 by %c245_i32 dim 1 : vector<8x256xf32>, i32 -> vector<8x256xf32>
    %28 = tpu.concatenate %20, %21, %22, %23, %6, %24, %25, %26, %27 in 0 : vector<8x256xf32>, vector<8x256xf32>, vector<8x256xf32>, vector<8x256xf32>, vector<8x256xf32>, vector<8x256xf32>, vector<8x256xf32>, vector<8x256xf32>, vector<8x256xf32> -> vector<72x256xf32>
    %cst = arith.constant dense<0.000000e+00> : vector<8x256xf32>
    %29 = tpu.matmul %10, %28, %cst {dimension_numbers = #tpu.dot_dimension_numbers<[1], [0], [0], [1], [0, 0, 1, 1], [], []>} : vector<8x72xf32>, vector<72x256xf32>, vector<8x256xf32> -> vector<8x256xf32>
    %30 = vector.broadcast %12 : vector<8x1xf32> to vector<8x256xf32>
    %31 = arith.addf %29, %30 : vector<8x256xf32>
    %32 = arith.mulf %31, %9 : vector<8x256xf32>
    %cst_12 = arith.constant dense<0.000000e+00> : vector<8xf32>
    %33 = vector.multi_reduction <add>, %32, %cst_12 [1] : vector<8x256xf32> to vector<8xf32>
    %34 = vector.shape_cast %33 : vector<8xf32> to vector<8x1xf32>
    %cst_13 = arith.constant 7.812500e-03 : f32
    %35 = vector.broadcast %cst_13 : f32 to vector<8x1xf32>
    %36 = arith.mulf %34, %35 : vector<8x1xf32>
    %37 = vector.broadcast %36 : vector<8x1xf32> to vector<8x256xf32>
    %38 = arith.subf %31, %37 : vector<8x256xf32>
    %39 = arith.mulf %38, %38 : vector<8x256xf32>
    %40 = arith.mulf %39, %9 : vector<8x256xf32>
    %cst_14 = arith.constant dense<0.000000e+00> : vector<8xf32>
    %41 = vector.multi_reduction <add>, %40, %cst_14 [1] : vector<8x256xf32> to vector<8xf32>
    %42 = vector.shape_cast %41 : vector<8xf32> to vector<8x1xf32>
    %cst_15 = arith.constant 7.812500e-03 : f32
    %43 = vector.broadcast %cst_15 : f32 to vector<8x1xf32>
    %44 = arith.mulf %42, %43 : vector<8x1xf32>
    %cst_16 = arith.constant 9.99999974E-6 : f32
    %45 = vector.broadcast %cst_16 : f32 to vector<8x1xf32>
    %46 = arith.addf %44, %45 : vector<8x1xf32>
    %47 = math.rsqrt %46 : vector<8x1xf32>
    %48 = vector.broadcast %47 : vector<8x1xf32> to vector<8x256xf32>
    %49 = arith.mulf %38, %48 : vector<8x256xf32>
    %50 = arith.mulf %16, %49 : vector<8x256xf32>
    %51 = arith.addf %50, %19 : vector<8x256xf32>
    %cst_17 = arith.constant 0.000000e+00 : f32
    %52 = vector.broadcast %cst_17 : f32 to vector<8x256xf32>
    %53 = arith.maximumf %51, %52 : vector<8x256xf32>
    %54 = arith.mulf %53, %9 : vector<8x256xf32>
    %c11_i32_18 = arith.constant 11 : i32
    %55 = tpu.dynamic_rotate %54 by %c11_i32_18 dim 1 : vector<8x256xf32>, i32 -> vector<8x256xf32>
    %c10_i32_19 = arith.constant 10 : i32
    %56 = tpu.dynamic_rotate %54 by %c10_i32_19 dim 1 : vector<8x256xf32>, i32 -> vector<8x256xf32>
    %c9_i32_20 = arith.constant 9 : i32
    %57 = tpu.dynamic_rotate %54 by %c9_i32_20 dim 1 : vector<8x256xf32>, i32 -> vector<8x256xf32>
    %c1_i32_21 = arith.constant 1 : i32
    %58 = tpu.dynamic_rotate %54 by %c1_i32_21 dim 1 : vector<8x256xf32>, i32 -> vector<8x256xf32>
    %c255_i32_22 = arith.constant 255 : i32
    %59 = tpu.dynamic_rotate %54 by %c255_i32_22 dim 1 : vector<8x256xf32>, i32 -> vector<8x256xf32>
    %c247_i32_23 = arith.constant 247 : i32
    %60 = tpu.dynamic_rotate %54 by %c247_i32_23 dim 1 : vector<8x256xf32>, i32 -> vector<8x256xf32>
    %c246_i32_24 = arith.constant 246 : i32
    %61 = tpu.dynamic_rotate %54 by %c246_i32_24 dim 1 : vector<8x256xf32>, i32 -> vector<8x256xf32>
    %c245_i32_25 = arith.constant 245 : i32
    %62 = tpu.dynamic_rotate %54 by %c245_i32_25 dim 1 : vector<8x256xf32>, i32 -> vector<8x256xf32>
    %63 = tpu.concatenate %55, %56, %57, %58, %54, %59, %60, %61, %62 in 0 : vector<8x256xf32>, vector<8x256xf32>, vector<8x256xf32>, vector<8x256xf32>, vector<8x256xf32>, vector<8x256xf32>, vector<8x256xf32>, vector<8x256xf32>, vector<8x256xf32> -> vector<72x256xf32>
    %cst_26 = arith.constant dense<0.000000e+00> : vector<8x256xf32>
    %64 = tpu.matmul %11, %63, %cst_26 {dimension_numbers = #tpu.dot_dimension_numbers<[1], [0], [0], [1], [0, 0, 1, 1], [], []>} : vector<8x72xf32>, vector<72x256xf32>, vector<8x256xf32> -> vector<8x256xf32>
    %65 = vector.broadcast %13 : vector<8x1xf32> to vector<8x256xf32>
    %66 = arith.addf %64, %65 : vector<8x256xf32>
    %67 = arith.mulf %66, %9 : vector<8x256xf32>
    %cst_27 = arith.constant dense<0.000000e+00> : vector<8xf32>
    %68 = vector.multi_reduction <add>, %67, %cst_27 [1] : vector<8x256xf32> to vector<8xf32>
    %69 = vector.shape_cast %68 : vector<8xf32> to vector<8x1xf32>
    %cst_28 = arith.constant 7.812500e-03 : f32
    %70 = vector.broadcast %cst_28 : f32 to vector<8x1xf32>
    %71 = arith.mulf %69, %70 : vector<8x1xf32>
    %72 = vector.broadcast %71 : vector<8x1xf32> to vector<8x256xf32>
    %73 = arith.subf %66, %72 : vector<8x256xf32>
    %74 = arith.mulf %73, %73 : vector<8x256xf32>
    %75 = arith.mulf %74, %9 : vector<8x256xf32>
    %cst_29 = arith.constant dense<0.000000e+00> : vector<8xf32>
    %76 = vector.multi_reduction <add>, %75, %cst_29 [1] : vector<8x256xf32> to vector<8xf32>
    %77 = vector.shape_cast %76 : vector<8xf32> to vector<8x1xf32>
    %cst_30 = arith.constant 7.812500e-03 : f32
    %78 = vector.broadcast %cst_30 : f32 to vector<8x1xf32>
    %79 = arith.mulf %77, %78 : vector<8x1xf32>
    %cst_31 = arith.constant 9.99999974E-6 : f32
    %80 = vector.broadcast %cst_31 : f32 to vector<8x1xf32>
    %81 = arith.addf %79, %80 : vector<8x1xf32>
    %82 = math.rsqrt %81 : vector<8x1xf32>
    %83 = vector.broadcast %82 : vector<8x1xf32> to vector<8x256xf32>
    %84 = arith.mulf %73, %83 : vector<8x256xf32>
    %85 = arith.mulf %16, %84 : vector<8x256xf32>
    %86 = arith.addf %85, %19 : vector<8x256xf32>
    %cst_32 = arith.constant 0.000000e+00 : f32
    %87 = vector.broadcast %cst_32 : f32 to vector<8x256xf32>
    %88 = arith.maximumf %86, %87 : vector<8x256xf32>
    %89 = arith.mulf %88, %9 : vector<8x256xf32>
    %c0_33 = arith.constant 0 : index
    %c0_34 = arith.constant 0 : index
    %90 = vector.load %arg2[%c0_33, %c0_34] : memref<8x256xf32, #tpu.memory_space<vmem>>, vector<8x256xf32>
    tpu.vector_store %arg2[%c0_33, %c0_34], %89 {strides = array<i32>} : memref<8x256xf32, #tpu.memory_space<vmem>>, vector<8x256xf32>,
    return
  }
}

</mosaic_0001>

<llo_original>
// kernel: down_forward.1
$region0: #{down_forward.1}
  #allocation0 [shape = 'u32[]', space=smem, size = 0x4, offset = 0x4, fixed_abs, tag = 'smem constant byte address 0x4 - core index']
  #allocation1 [shape = 'u32[144,128]{1,0:T(1,128)}', space=vmem, size = 0x12000, scoped, tag = 'internal scratch']
  %s0 = inlined_call_operand.vmem [shape: f32[33,256], index: 0, kind: input, shape index: {}]
  %s1 = inlined_call_operand.vmem [shape: f32[8,260], index: 1, kind: input, shape index: {}]
  %s2 = inlined_call_operand.vmem [shape: f32[8,256], index: 2, kind: output, shape index: {}]
  %s3 = sld [smem:[#allocation0]]
  $region18: #{down_forward.1} parent=0
    _
  %s5 = ssub.s32 1, %s3
  %s6 = scalar_select 0, %s5, %s3
  // Predicated region
  $region2: #{down_forward.1} parent=0 // pred_check
    _
  $region3: #{down_forward.1} parent=0 // pred_check_branch
    %8 = sbr.rel (0) target = $region5
  $region4: #{down_forward.1} parent=0 // pred_region
    _
  $region5: #{down_forward.1} parent=0 // pred_fallthru
    _
  // Predicated region
  $region6: #{down_forward.1} parent=0 // pred_check
    _
  $region7: #{down_forward.1} parent=0 // pred_check_branch
    %10 = sbr.rel (0) target = $region9
  $region8: #{down_forward.1} parent=0 // pred_region
    _
  $region9: #{down_forward.1} parent=0 // pred_fallthru
    _
  %v11 = vld [vmem:[%s0] sm:$0xff]
  %v12 = vld [vmem:[%s0 + $0x8] sm:$0xff]
  %v13 = vld [vmem:[%s0 + $0x10] sm:$0xff]
  %v14 = vld [vmem:[%s0 + $0x18] sm:$0xff]
  %v15 = vmax.f32 %v11, %v13
  %v16 = vmax.f32 %v12, %v14
  %v17 = vld [vmem:[%s0 + $0x20] sm:$0xff]
  %v18 = vld [vmem:[%s0 + $0x28] sm:$0xff]
  %v19 = vld [vmem:[%s0 + $0x30] sm:$0xff]
  %v20 = vld [vmem:[%s0 + $0x38] sm:$0xff]
  %v21 = vmax.f32 %v17, %v19
  %v22 = vmax.f32 %v18, %v20
  %v23 = vmax.f32 %v15, %v21
  %v24 = vmax.f32 %v16, %v22
  %s25 = scalar_lea.vmem %s0, 64
  %v26 = vld [vmem:[%s25] ss:$8 sm:$0x3]
  %v28 = vlaneseq
  %v29 = vshrl.u32 %v28, 7
  %v30 = vsub.s32 0, %v29
  %v31 = vrot.slane %v26, %v30
  %v32 = vlaneseq
  %v33 = vshrl.u32 %v32, 7
  %v34 = vsub.s32 1, %v33
  %v35 = vrot.slane %v26, %v34
  %v38 = vld [vmem:[%s1] sm:$0xff]
  %v39 = vld [vmem:[%s1 + $0x8] sm:$0xff]
  %v40 = vld [vmem:[%s1 + $0x10] sm:$0xff]
  %42 = vset.pattern.permute.xlu0 2
  %43 = vperm.xlu0 %42, %v40
  %v44 = vpop.permute.xlu0 %43
  %46 = vset.pattern.permute.xlu0 3
  %47 = vperm.xlu0 %46, %v40
  %v48 = vpop.permute.xlu0 %47
  %50 = vrot.lane.b32.xlu0 %v23, 11
  %v51 = vpop.permute.xlu0 %50
  %52 = vrot.lane.b32.xlu0 %v24, 11
  %v53 = vpop.permute.xlu0 %52
  %v54 = vlaneseq
  %v55 = vand.u32 %v54, 127
  %vm56 = vcmp.lt.s32.totalorder %v55, 11
  %v57 = vsel %vm56, %v51, %v53
  %v58 = vsel %vm56, %v53, %v51
  %59 = vrot.lane.b32.xlu0 %v23, 10
  %v60 = vpop.permute.xlu0 %59
  %61 = vrot.lane.b32.xlu0 %v24, 10
  %v62 = vpop.permute.xlu0 %61
  %vm63 = vcmp.lt.s32.totalorder %v55, 10
  %v64 = vsel %vm63, %v60, %v62
  %v65 = vsel %vm63, %v62, %v60
  %66 = vrot.lane.b32.xlu0 %v23, 9
  %v67 = vpop.permute.xlu0 %66
  %68 = vrot.lane.b32.xlu0 %v24, 9
  %v69 = vpop.permute.xlu0 %68
  %vm70 = vcmp.lt.s32.totalorder %v55, 9
  %v71 = vsel %vm70, %v67, %v69
  %v72 = vsel %vm70, %v69, %v67
  %73 = vrot.lane.b32.xlu0 %v23, 1
  %v74 = vpop.permute.xlu0 %73
  %75 = vrot.lane.b32.xlu0 %v24, 1
  %v76 = vpop.permute.xlu0 %75
  %vm77 = vcmp.lt.s32.totalorder %v55, 1
  %v78 = vsel %vm77, %v74, %v76
  %v79 = vsel %vm77, %v76, %v74
  %80 = vrot.lane.b32.xlu0 %v23, 127
  %v81 = vpop.permute.xlu0 %80
  %82 = vrot.lane.b32.xlu0 %v24, 127
  %v83 = vpop.permute.xlu0 %82
  %vm84 = vcmp.lt.s32.totalorder %v55, 127
  %v85 = vsel %vm84, %v81, %v83
  %v86 = vsel %vm84, %v83, %v81
  %87 = vrot.lane.b32.xlu0 %v23, 119
  %v88 = vpop.permute.xlu0 %87
  %89 = vrot.lane.b32.xlu0 %v24, 119
  %v90 = vpop.permute.xlu0 %89
  %vm91 = vcmp.lt.s32.totalorder %v55, 119
  %v92 = vsel %vm91, %v88, %v90
  %v93 = vsel %vm91, %v90, %v88
  %94 = vrot.lane.b32.xlu0 %v23, 118
  %v95 = vpop.permute.xlu0 %94
  %96 = vrot.lane.b32.xlu0 %v24, 118
  %v97 = vpop.permute.xlu0 %96
  %vm98 = vcmp.lt.s32.totalorder %v55, 118
  %v99 = vsel %vm98, %v95, %v97
  %v100 = vsel %vm98, %v97, %v95
  %101 = vrot.lane.b32.xlu0 %v23, 117
  %v102 = vpop.permute.xlu0 %101
  %103 = vrot.lane.b32.xlu0 %v24, 117
  %v104 = vpop.permute.xlu0 %103
  %vm105 = vcmp.lt.s32.totalorder %v55, 117
  %v106 = vsel %vm105, %v102, %v104
  %v107 = vsel %vm105, %v104, %v102
  %108 = vset.pattern.permute.xlu0 0
  %109 = vperm.xlu0 %108, %v40
  %v110 = vpop.permute.xlu0 %109
  %vm112 = vcmask 588800
  %v114 = vsel %vm112, %v38, 0
  %116 = vmatprep.subr.mxu0 %v57
  %117 = vmatpush1.msra.mxu0 %v58
  %118 = vmatprep.subr.mxu0 %v64
  %119 = vmatpush1.msra.mxu0 %v65
  %120 = vmatprep.subr.mxu0 %v71
  %121 = vmatpush1.msra.mxu0 %v72
  %122 = vmatprep.subr.mxu0 %v78
  %123 = vmatpush1.msra.mxu0 %v79
  %124 = vmatprep.subr.mxu0 %v24
  %125 = vmatpush1.msra.mxu0 %v23
  %126 = vmatprep.subr.mxu0 %v86
  %127 = vmatpush1.msra.mxu0 %v85
  %128 = vmatprep.subr.mxu0 %v93
  %129 = vmatpush1.msra.mxu0 %v92
  %130 = vmatprep.subr.mxu0 %v100
  %131 = vmatpush1.msra.mxu0 %v99
  %132 = vmatprep.subr.mxu0 %v107
  %133 = vmatpush1.msra.mxu0 %v106
  %134 = vmatprep.subr.mxu0 0.0
  %135 = vmatpush1.msra.mxu0 0.0
  %136 = vmatprep.subr.mxu0 0.0
  %137 = vmatpush1.msra.mxu0 0.0
  %138 = vmatprep.subr.mxu0 0.0
  %139 = vmatpush1.msra.mxu0 0.0
  %140 = vmatprep.subr.mxu0 0.0
  %141 = vmatpush1.msra.mxu0 0.0
  %142 = vmatprep.subr.mxu0 0.0
  %143 = vmatpush1.msra.mxu0 0.0
  %144 = vmatprep.subr.mxu0 0.0
  %145 = vmatpush1.msra.mxu0 0.0
  %146 = vmatprep.subr.mxu0 0.0
  %147 = vmatpush1.msra.mxu0 0.0
  %148 = vmatprep.subr.mxu0 0.0
  %149 = vmatpush1.msra.mxu0 0.0
  %150 = vmatprep.subr.mxu0 0.0
  %151 = vmatpush1.msra.mxu0 0.0
  %152 = vmatprep.subr.mxu0 0.0
  %153 = vmatpush1.msra.mxu0 0.0
  %154 = vmatprep.subr.mxu0 0.0
  %155 = vmatpush1.msra.mxu0 0.0
  %156 = vmatprep.subr.mxu0 0.0
  %157 = vmatpush1.msra.mxu0 0.0
  %158 = vmatprep.subr.mxu0 0.0
  %159 = vmatpush1.msra.mxu0 0.0
  %160 = vmatprep.subr.mxu0 0.0
  %161 = vmatpush1.msra.mxu0 0.0
  %162 = vmatprep.subr.mxu0 0.0
  %163 = vmatpush1.msra.mxu0 0.0
  %164 = vmatprep.subr.mxu0 0.0
  %165 = vmatpush1.msra.mxu0 0.0
  %166 = vmatprep.subr.mxu0 0.0
  %167 = vmatpush1.msra.mxu0 0.0
  %168 = vmatprep.subr.mxu0 0.0
  %169 = vmatpush1.msra.mxu0 0.0
  %170 = vmatprep.subr.mxu0 0.0
  %171 = vmatpush1.msra.mxu0 0.0
  %172 = vmatprep.subr.mxu0 0.0
  %173 = vmatpush1.msra.mxu0 0.0
  %174 = vmatprep.subr.mxu0 0.0
  %175 = vmatpush1.msra.mxu0 0.0
  %176 = vmatprep.subr.mxu0 0.0
  %177 = vmatpush1.msra.mxu0 0.0
  %178 = vmatprep.subr.mxu0 0.0
  %179 = vmatpush1.msra.mxu0 0.0
  %180 = vmatprep.mubr.f32.mxu0 0.0
  %181 = vmatmul.mubr.f32.gmra.mrb[0].mxu0 %v114
  %v182 = vpop.f32.mrb[0].mxu0
  %v183 = vadd.f32 %v110, %v182
  %v184 = vpop.f32.mrb[0].mxu0
  %v185 = vadd.f32 %v110, %v184
  %186 = vdwg.mxu0
  %v187 = vmul.f32 %v183, %v31
  %v188 = vmul.f32 %v185, %v35
  %v189 = vadd.f32 %v187, %v188
  %190 = vadd.xlane.f32.xlu0 %v189
  %v191 = vpop.xlane.xlu0 %190
  %v192 = vmul.f32 %v191, 0.0078125
  %v193 = vsub.f32 %v183, %v192
  %v194 = vsub.f32 %v185, %v192
  %v195 = vmul.f32 %v193, %v193
  %v196 = vmul.f32 %v194, %v194
  %v197 = vmul.f32 %v195, %v31
  %v198 = vmul.f32 %v196, %v35
  %v199 = vadd.f32 %v197, %v198
  %200 = vadd.xlane.f32.xlu0 %v199
  %v201 = vpop.xlane.xlu0 %200
  %v202 = vmul.f32 %v201, 0.0078125
  %v203 = vadd.f32 %v202, 1e-05
  %v204 = vrsqrt.pop %v203
  %v205 = vmul.f32 %v193, %v204
  %v206 = vmul.f32 %v194, %v204
  %v207 = vmul.f32 %v44, %v205
  %v208 = vmul.f32 %v44, %v206
  %v209 = vadd.f32 %v207, %v48
  %v210 = vadd.f32 %v208, %v48
  %v211 = vmax.f32 %v209, 0.0
  %v212 = vmax.f32 %v210, 0.0
  %v213 = vmul.f32 %v211, %v31
  %v214 = vmul.f32 %v212, %v35
  %215 = vrot.lane.b32.xlu0 %v213, 11
  %v216 = vpop.permute.xlu0 %215
  %217 = vrot.lane.b32.xlu0 %v214, 11
  %v218 = vpop.permute.xlu0 %217
  %v219 = vsel %vm56, %v216, %v218
  %v220 = vsel %vm56, %v218, %v216
  %221 = vrot.lane.b32.xlu0 %v213, 10
  %v222 = vpop.permute.xlu0 %221
  %223 = vrot.lane.b32.xlu0 %v214, 10
  %v224 = vpop.permute.xlu0 %223
  %v225 = vsel %vm63, %v222, %v224
  %v226 = vsel %vm63, %v224, %v222
  %227 = vrot.lane.b32.xlu0 %v213, 9
  %v228 = vpop.permute.xlu0 %227
  %229 = vrot.lane.b32.xlu0 %v214, 9
  %v230 = vpop.permute.xlu0 %229
  %v231 = vsel %vm70, %v228, %v230
  %v232 = vsel %vm70, %v230, %v228
  %233 = vrot.lane.b32.xlu0 %v213, 1
  %v234 = vpop.permute.xlu0 %233
  %235 = vrot.lane.b32.xlu0 %v214, 1
  %v236 = vpop.permute.xlu0 %235
  %v237 = vsel %vm77, %v234, %v236
  %v238 = vsel %vm77, %v236, %v234
  %239 = vrot.lane.b32.xlu0 %v213, 127
  %v240 = vpop.permute.xlu0 %239
  %241 = vrot.lane.b32.xlu0 %v214, 127
  %v242 = vpop.permute.xlu0 %241
  %v243 = vsel %vm84, %v240, %v242
  %v244 = vsel %vm84, %v242, %v240
  %245 = vrot.lane.b32.xlu0 %v213, 119
  %v246 = vpop.permute.xlu0 %245
  %247 = vrot.lane.b32.xlu0 %v214, 119
  %v248 = vpop.permute.xlu0 %247
  %v249 = vsel %vm91, %v246, %v248
  %v250 = vsel %vm91, %v248, %v246
  %251 = vrot.lane.b32.xlu0 %v213, 118
  %v252 = vpop.permute.xlu0 %251
  %253 = vrot.lane.b32.xlu0 %v214, 118
  %v254 = vpop.permute.xlu0 %253
  %v255 = vsel %vm98, %v252, %v254
  %v256 = vsel %vm98, %v254, %v252
  %257 = vrot.lane.b32.xlu0 %v213, 117
  %v258 = vpop.permute.xlu0 %257
  %259 = vrot.lane.b32.xlu0 %v214, 117
  %v260 = vpop.permute.xlu0 %259
  %v261 = vsel %vm105, %v258, %v260
  %v262 = vsel %vm105, %v260, %v258
  %263 = vset.pattern.permute.xlu0 1
  %264 = vperm.xlu0 %263, %v40
  %v265 = vpop.permute.xlu0 %264
  %v268 = vsel %vm112, %v39, 0
  %270 = vmatprep.subr.mxu0 %v219
  %271 = vmatpush1.msra.mxu0 %v220
  %272 = vmatprep.subr.mxu0 %v225
  %273 = vmatpush1.msra.mxu0 %v226
  %274 = vmatprep.subr.mxu0 %v231
  %275 = vmatpush1.msra.mxu0 %v232
  %276 = vmatprep.subr.mxu0 %v237
  %277 = vmatpush1.msra.mxu0 %v238
  %278 = vmatprep.subr.mxu0 %v214
  %279 = vmatpush1.msra.mxu0 %v213
  %280 = vmatprep.subr.mxu0 %v244
  %281 = vmatpush1.msra.mxu0 %v243
  %282 = vmatprep.subr.mxu0 %v250
  %283 = vmatpush1.msra.mxu0 %v249
  %284 = vmatprep.subr.mxu0 %v256
  %285 = vmatpush1.msra.mxu0 %v255
  %286 = vmatprep.subr.mxu0 %v262
  %287 = vmatpush1.msra.mxu0 %v261
  %288 = vmatprep.subr.mxu0 0.0
  %289 = vmatpush1.msra.mxu0 0.0
  %290 = vmatprep.subr.mxu0 0.0
  %291 = vmatpush1.msra.mxu0 0.0
  %292 = vmatprep.subr.mxu0 0.0
  %293 = vmatpush1.msra.mxu0 0.0
  %294 = vmatprep.subr.mxu0 0.0
  %295 = vmatpush1.msra.mxu0 0.0
  %296 = vmatprep.subr.mxu0 0.0
  %297 = vmatpush1.msra.mxu0 0.0
  %298 = vmatprep.subr.mxu0 0.0
  %299 = vmatpush1.msra.mxu0 0.0
  %300 = vmatprep.subr.mxu0 0.0
  %301 = vmatpush1.msra.mxu0 0.0
  %302 = vmatprep.subr.mxu0 0.0
  %303 = vmatpush1.msra.mxu0 0.0
  %304 = vmatprep.subr.mxu0 0.0
  %305 = vmatpush1.msra.mxu0 0.0
  %306 = vmatprep.subr.mxu0 0.0
  %307 = vmatpush1.msra.mxu0 0.0
  %308 = vmatprep.subr.mxu0 0.0
  %309 = vmatpush1.msra.mxu0 0.0
  %310 = vmatprep.subr.mxu0 0.0
  %311 = vmatpush1.msra.mxu0 0.0
  %312 = vmatprep.subr.mxu0 0.0
  %313 = vmatpush1.msra.mxu0 0.0
  %314 = vmatprep.subr.mxu0 0.0
  %315 = vmatpush1.msra.mxu0 0.0
  %316 = vmatprep.subr.mxu0 0.0
  %317 = vmatpush1.msra.mxu0 0.0
  %318 = vmatprep.subr.mxu0 0.0
  %319 = vmatpush1.msra.mxu0 0.0
  %320 = vmatprep.subr.mxu0 0.0
  %321 = vmatpush1.msra.mxu0 0.0
  %322 = vmatprep.subr.mxu0 0.0
  %323 = vmatpush1.msra.mxu0 0.0
  %324 = vmatprep.subr.mxu0 0.0
  %325 = vmatpush1.msra.mxu0 0.0
  %326 = vmatprep.subr.mxu0 0.0
  %327 = vmatpush1.msra.mxu0 0.0
  %328 = vmatprep.subr.mxu0 0.0
  %329 = vmatpush1.msra.mxu0 0.0
  %330 = vmatprep.subr.mxu0 0.0
  %331 = vmatpush1.msra.mxu0 0.0
  %332 = vmatprep.subr.mxu0 0.0
  %333 = vmatpush1.msra.mxu0 0.0
  %334 = vmatprep.mubr.f32.mxu0 0.0
  %335 = vmatmul.mubr.f32.gmra.mrb[0].mxu0 %v268
  %v336 = vpop.f32.mrb[0].mxu0
  %v337 = vadd.f32 %v265, %v336
  %v338 = vpop.f32.mrb[0].mxu0
  %v339 = vadd.f32 %v265, %v338
  %340 = vdwg.mxu0
  %v341 = vmul.f32 %v337, %v31
  %v342 = vmul.f32 %v339, %v35
  %v343 = vadd.f32 %v341, %v342
  %344 = vadd.xlane.f32.xlu0 %v343
  %v345 = vpop.xlane.xlu0 %344
  %v346 = vmul.f32 %v345, 0.0078125
  %v347 = vsub.f32 %v337, %v346
  %v348 = vsub.f32 %v339, %v346
  %v349 = vmul.f32 %v347, %v347
  %v350 = vmul.f32 %v348, %v348
  %v351 = vmul.f32 %v349, %v31
  %v352 = vmul.f32 %v350, %v35
  %v353 = vadd.f32 %v351, %v352
  %354 = vadd.xlane.f32.xlu0 %v353
  %v355 = vpop.xlane.xlu0 %354
  %v356 = vmul.f32 %v355, 0.0078125
  %v357 = vadd.f32 %v356, 1e-05
  %v358 = vrsqrt.pop %v357
  %v359 = vmul.f32 %v347, %v358
  %v360 = vmul.f32 %v348, %v358
  %v361 = vmul.f32 %v44, %v359
  %v362 = vmul.f32 %v44, %v360
  %v363 = vadd.f32 %v361, %v48
  %v364 = vadd.f32 %v362, %v48
  %v365 = vmax.f32 %v363, 0.0
  %v366 = vmax.f32 %v364, 0.0
  %v367 = vmul.f32 %v365, %v31
  %v368 = vmul.f32 %v366, %v35
  %369 = vst [vmem:[%s2] sm:$0xff] %v367
  %370 = vst [vmem:[%s2 + $0x8] sm:$0xff] %v368
  // Predicated region
  $region10: #{down_forward.1} parent=0 // pred_check
    _
  $region11: #{down_forward.1} parent=0 // pred_check_branch
    %372 = sbr.rel (0) target = $region13
  $region12: #{down_forward.1} parent=0 // pred_region
    _
  $region13: #{down_forward.1} parent=0 // pred_fallthru
    _
  // Predicated region
  $region14: #{down_forward.1} parent=0 // pred_check
    _
  $region15: #{down_forward.1} parent=0 // pred_check_branch
    %374 = sbr.rel (0) target = $region17
  $region16: #{down_forward.1} parent=0 // pred_region
    _
  $region17: #{down_forward.1} parent=0 // pred_fallthru
    _

</llo_original>
